<compile_context>
chip_gen: v7x
topology: tpu7x:2x2x1
jax: 0.10.0
libtpu: 0.0.40
codegen_flags: <defaults>
</compile_context>

<pallas_src>
import functools

import jax
import jax.numpy as jnp
from jax.experimental import pallas as pl
from jax.experimental.pallas import tpu as pltpu

LATDIM = 32
NUM_EXPERTS = 4
LANE = 128


# ----------------------------------------------------------------------------
# Fused Pallas kernel
# ----------------------------------------------------------------------------
def _moe_gcn_layer(xb, a_b, w_fused, bias, *, num_experts):
    """One MoE-GCN layer on VMEM-resident operands.

    xb, a_b, w_fused are bf16; bias is f32.
    w_fused packs [W_expert_0 | ... | W_expert_{E-1} | W_router] along the
    lane axis so the expert transform and the router logits come out of a
    single MXU pass.  Returns (out_f32, logits_f32).
    """
    fout = (w_fused.shape[1] - num_experts) // num_experts

    # Single fused matmul: expert features + router logits.
    he_all = jnp.dot(xb, w_fused, preferred_element_type=jnp.float32)  # [N, E*Fout+E]
    logits = he_all[:, num_experts * fout:]                            # [N, E]

    # softmax gate (exp on EUP, approx reciprocal on EUP).
    m = jnp.max(logits, axis=-1, keepdims=True)
    e = jnp.exp(logits - m)
    gate = e * pl.reciprocal(jnp.sum(e, axis=-1, keepdims=True), approx=True)

    # Gate applied on VPU over static fout-lane slices.
    h = gate[:, 0:1] * he_all[:, 0:fout]
    for k in range(1, num_experts):
        h = h + gate[:, k:k + 1] * he_all[:, k * fout:(k + 1) * fout]

    # Graph aggregation (keep A @ (xW) order) + bias.
    agg = jnp.dot(a_b, h.astype(jnp.bfloat16),
                  preferred_element_type=jnp.float32)                   # [N, Fout]
    return agg + bias, logits


def _fused_gcn_m_kernel(x_ref, a_ref,
                        w1_ref, b1_ref,
                        w2_ref, b2_ref,
                        w3_ref, b3_ref,
                        wp_ref, bp_ref, sel_ref,
                        slab_ref,
                        *, num_experts, emb_dim, p_pad):
    a_b = a_ref[...]                         # bf16 [N, N], loaded once, reused 3x
    xb = x_ref[...].astype(jnp.bfloat16)     # f32 input cast in-kernel (VPU, fused)

    h1, l1 = _moe_gcn_layer(xb, a_b, w1_ref[...], b1_ref[...],
                            num_experts=num_experts)
    # dropout: eval-mode identity
    h2, l2 = _moe_gcn_layer(h1.astype(jnp.bfloat16), a_b, w2_ref[...], b2_ref[...],
                            num_experts=num_experts)
    embed, l3 = _moe_gcn_layer(h2.astype(jnp.bfloat16), a_b, w3_ref[...], b3_ref[...],
                               num_experts=num_experts)

    # Fused link prediction: one stacked one-hot gather matmul (src rows first,
    # dst rows second), split by sublane slice, VPU multiply + lane reduction.
    emb_b = embed.astype(jnp.bfloat16)
    h_both = jnp.dot(sel_ref[...], emb_b,
                     preferred_element_type=jnp.float32)          # [2*Pp, latdim]
    mult = h_both[0:p_pad, :] * h_both[p_pad:2 * p_pad, :]        # [Pp, latdim]
    pred = jnp.sum(mult * wp_ref[...], axis=-1, keepdims=True) + bp_ref[...]

    # Single lane-dense output slab [N, 128]:
    #   lanes [0, emb)                      embed
    #   lanes [emb, emb+E)                  router logits conv1
    #   lanes [emb+E, emb+2E)               router logits conv2
    #   lanes [emb+2E, emb+3E)              router logits conv3
    #   lane  emb+3E, rows [0, P_pad)       link prediction
    slab_ref[...] = jnp.zeros_like(slab_ref)
    slab_ref[:, 0:emb_dim] = embed
    off = emb_dim
    slab_ref[:, off:off + num_experts] = l1
    slab_ref[:, off + num_experts:off + 2 * num_experts] = l2
    slab_ref[:, off + 2 * num_experts:off + 3 * num_experts] = l3
    pred_lane = off + 3 * num_experts
    slab_ref[0:p_pad, pred_lane:pred_lane + 1] = pred


# ----------------------------------------------------------------------------
# Pallas wrapper
# ----------------------------------------------------------------------------
@functools.partial(jax.jit, static_argnames=("num_experts", "emb_dim", "num_edges"))
def gcn_m_forward(prep, x, a_b, sel, *, num_experts, emb_dim, num_edges):
    """Forward pass.  prep / a_b / sel are precomputed (see prepare_* below)."""
    n = x.shape[0]
    p_pad = sel.shape[0] // 2
    assert p_pad <= n, "prediction rows must fit in the [N, 128] slab"
    assert emb_dim + 3 * num_experts + 1 <= LANE

    w1, b1, w2, b2, w3, b3, wp_row, bp = prep
    operands = (x, a_b, w1, b1, w2, b2, w3, b3, wp_row, bp, sel)

    kernel = functools.partial(_fused_gcn_m_kernel, num_experts=num_experts,
                               emb_dim=emb_dim, p_pad=p_pad)
    slab = pl.pallas_call(
        kernel,
        out_shape=jax.ShapeDtypeStruct((n, LANE), jnp.float32),
        grid=(1,),
        in_specs=[pl.BlockSpec(op.shape, lambda i: (0, 0)) for op in operands],
        out_specs=pl.BlockSpec((n, LANE), lambda i: (0, 0)),
        compiler_params=pltpu.CompilerParams(
            dimension_semantics=("arbitrary",)),
    )(*operands)

    embed = slab[:, :emb_dim]
    off = emb_dim
    all_router_logits = [
        slab[:, off + i * num_experts: off + (i + 1) * num_experts]
        for i in range(3)
    ]
    pred_out = slab[:num_edges, off + 3 * num_experts]
    return pred_out, all_router_logits, embed


# ----------------------------------------------------------------------------
# One-time preparation (hoisted out of the per-call path)
# ----------------------------------------------------------------------------
def prepare_params(params):
    """Pre-cast to bf16 and pre-concatenate [W_experts | W_router] per layer."""
    def fuse(layer):
        wr, we, bias = layer
        w_fused = jnp.concatenate([we, wr], axis=1).astype(jnp.bfloat16)
        return w_fused, bias.astype(jnp.float32)

    w1, b1 = fuse(params["conv1"])
    w2, b2 = fuse(params["conv2"])
    w3, b3 = fuse(params["conv3"])
    wp_row = params["lin_pred_w"].T.astype(jnp.float32)          # [1, latdim]
    bp = params["lin_pred_b"].astype(jnp.float32)                # [1, 1]
    return (w1, b1, w2, b2, w3, b3, wp_row, bp)


def build_norm_adj(edge_index, num_nodes):
    a = jnp.zeros((num_nodes, num_nodes), jnp.float32)
    a = a.at[edge_index[0], edge_index[1]].set(1.0)
    diag = jnp.arange(num_nodes)
    # Self-loops with fill value 1 (matches PyG gcn_norm even if the edge list
    # already contains self-loops).
    a = a.at[diag, diag].set(1.0)
    deg = jnp.sum(a, axis=1)
    d_inv_sqrt = jnp.where(deg > 0, 1.0 / jnp.sqrt(deg), 0.0)
    return a * d_inv_sqrt[:, None] * d_inv_sqrt[None, :]


def prepare_label_edges(edge_label_index, num_nodes):
    """Stacked one-hot selection matrix [2*P_pad, N] (src rows, then dst rows)."""
    p = edge_label_index.shape[1]
    p_pad = max(8, -(-p // 8) * 8)
    node_ids = jnp.arange(num_nodes, dtype=jnp.int32)
    s_src = (edge_label_index[0][:, None] == node_ids[None, :]).astype(jnp.float32)
    s_dst = (edge_label_index[1][:, None] == node_ids[None, :]).astype(jnp.float32)
    s_src = jnp.pad(s_src, ((0, p_pad - p), (0, 0)))
    s_dst = jnp.pad(s_dst, ((0, p_pad - p), (0, 0)))
    return jnp.concatenate([s_src, s_dst], axis=0).astype(jnp.bfloat16)


# ----------------------------------------------------------------------------
# Parameter init (matches the torch module's layer sizes)
# ----------------------------------------------------------------------------
def init_layer_params(key, fin, fout, num_experts=NUM_EXPERTS):
    k1, k2, k3 = jax.random.split(key, 3)
    w_router = jax.random.normal(k1, (fin, num_experts), jnp.float32) * 0.1
    w_experts = jax.random.normal(
        k2, (fin, num_experts * fout), jnp.float32) * (1.0 / jnp.sqrt(fin))
    bias = jax.random.normal(k3, (1, fout), jnp.float32) * 0.01
    return (w_router, w_experts, bias)


def init_params(key, latdim=LATDIM):
    keys = jax.random.split(key, 5)
    return {
        "conv1": init_layer_params(keys[0], latdim, latdim * 2),
        "conv2": init_layer_params(keys[1], latdim * 2, latdim * 2),
        "conv3": init_layer_params(keys[2], latdim * 2, latdim),
        "lin_pred_w": jax.random.normal(
            keys[3], (latdim, 1), jnp.float32) * (1.0 / jnp.sqrt(latdim)),
        "lin_pred_b": jax.random.normal(keys[4], (1, 1), jnp.float32) * 0.01,
    }


# ----------------------------------------------------------------------------
if __name__ == "__main__":
    key = jax.random.PRNGKey(0)
    k_param, k_x, k_lbl = jax.random.split(key, 3)

    N = 16           # nodes
    P = 8            # label edges to score
    params = init_params(k_param, LATDIM)
    prep = prepare_params(params)                 # one-time: bf16 fused weights

    x = jax.random.normal(k_x, (N, LATDIM), jnp.float32)

    # Symmetric ring graph (self loops added during normalization).
    src = jnp.arange(N, dtype=jnp.int32)
    dst = (src + 1) % N
    edge_index = jnp.concatenate(
        [jnp.stack([src, dst], axis=0), jnp.stack([dst, src], axis=0)], axis=1)

    edge_label_index = jax.random.randint(k_lbl, (2, P), 0, N, dtype=jnp.int32)

    # One-time: static-graph operands cached in their kernel dtypes.
    a_b = build_norm_adj(edge_index, N).astype(jnp.bfloat16)
    sel = prepare_label_edges(edge_label_index, N)

    pred_out, all_router_logits, embed = gcn_m_forward(
        prep, x, a_b, sel,
        num_experts=NUM_EXPERTS, emb_dim=LATDIM, num_edges=P)

    jax.block_until_ready(pred_out)
    jax.block_until_ready(embed)
    for rl in all_router_logits:
        jax.block_until_ready(rl)

    assert pred_out.shape == (P,)
    assert embed.shape == (N, LATDIM)
    assert [rl.shape for rl in all_router_logits] == [(N, NUM_EXPERTS)] * 3
    print("KERNEL_OK")
</pallas_src>

<mosaic_0001>
module attributes {stable_mosaic.version = 11 : i64} {
  func.func @_fused_gcn_m_kernel(%arg0: i32, %arg1: memref<16x32xf32, #tpu.memory_space<vmem>>, %arg2: memref<16x16xbf16, #tpu.memory_space<vmem>>, %arg3: memref<32x260xbf16, #tpu.memory_space<vmem>>, %arg4: memref<1x64xf32, #tpu.memory_space<vmem>>, %arg5: memref<64x260xbf16, #tpu.memory_space<vmem>>, %arg6: memref<1x64xf32, #tpu.memory_space<vmem>>, %arg7: memref<64x132xbf16, #tpu.memory_space<vmem>>, %arg8: memref<1x32xf32, #tpu.memory_space<vmem>>, %arg9: memref<1x32xf32, #tpu.memory_space<vmem>>, %arg10: memref<1x1xf32, #tpu.memory_space<vmem>>, %arg11: memref<16x16xbf16, #tpu.memory_space<vmem>>, %arg12: memref<16x128xf32, #tpu.memory_space<vmem>>) attributes {dimension_semantics = [#tpu.dimension_semantics<arbitrary>], iteration_bounds = array<i64: 1>, scalar_prefetch = 0 : i64, scratch_operands = 0 : i64, tpu.core_type = #tpu.core_type<tc>, window_params = [{pipeline_mode = #tpu.pipeline_mode<synchronous>, transform_indices = @transform_0, window_bounds = array<i64: 16, 32>}, {pipeline_mode = #tpu.pipeline_mode<synchronous>, transform_indices = @transform_1, window_bounds = array<i64: 16, 16>}, {pipeline_mode = #tpu.pipeline_mode<synchronous>, transform_indices = @transform_2, window_bounds = array<i64: 32, 260>}, {pipeline_mode = #tpu.pipeline_mode<synchronous>, transform_indices = @transform_3, window_bounds = array<i64: 1, 64>}, {pipeline_mode = #tpu.pipeline_mode<synchronous>, transform_indices = @transform_4, window_bounds = array<i64: 64, 260>}, {pipeline_mode = #tpu.pipeline_mode<synchronous>, transform_indices = @transform_5, window_bounds = array<i64: 1, 64>}, {pipeline_mode = #tpu.pipeline_mode<synchronous>, transform_indices = @transform_6, window_bounds = array<i64: 64, 132>}, {pipeline_mode = #tpu.pipeline_mode<synchronous>, transform_indices = @transform_7, window_bounds = array<i64: 1, 32>}, {pipeline_mode = #tpu.pipeline_mode<synchronous>, transform_indices = @transform_8, window_bounds = array<i64: 1, 32>}, {pipeline_mode = #tpu.pipeline_mode<synchronous>, transform_indices = @transform_9, window_bounds = array<i64: 1, 1>}, {pipeline_mode = #tpu.pipeline_mode<synchronous>, transform_indices = @transform_10, window_bounds = array<i64: 16, 16>}, {pipeline_mode = #tpu.pipeline_mode<synchronous>, transform_indices = @transform_11, window_bounds = array<i64: 16, 128>}]} {
    %c0 = arith.constant 0 : index
    %c0_0 = arith.constant 0 : index
    %0 = vector.load %arg2[%c0, %c0_0] : memref<16x16xbf16, #tpu.memory_space<vmem>>, vector<16x16xbf16>
    %c0_1 = arith.constant 0 : index
    %c0_2 = arith.constant 0 : index
    %1 = vector.load %arg1[%c0_1, %c0_2] : memref<16x32xf32, #tpu.memory_space<vmem>>, vector<16x32xf32>
    %2 = arith.truncf %1 : vector<16x32xf32> to vector<16x32xbf16>
    %c0_3 = arith.constant 0 : index
    %c0_4 = arith.constant 0 : index
    %3 = vector.load %arg3[%c0_3, %c0_4] : memref<32x260xbf16, #tpu.memory_space<vmem>>, vector<32x260xbf16>
    %c0_5 = arith.constant 0 : index
    %c0_6 = arith.constant 0 : index
    %4 = vector.load %arg4[%c0_5, %c0_6] : memref<1x64xf32, #tpu.memory_space<vmem>>, vector<1x64xf32>
    %cst = arith.constant dense<0.000000e+00> : vector<16x260xf32>
    %5 = tpu.matmul %2, %3, %cst {dimension_numbers = #tpu.dot_dimension_numbers<[1], [0], [0], [1], [0, 0, 1, 1], [], []>} : vector<16x32xbf16>, vector<32x260xbf16>, vector<16x260xf32> -> vector<16x260xf32>
    %6 = vector.extract_strided_slice %5 {offsets = [0, 256], sizes = [16, 4], strides = [1, 1]} : vector<16x260xf32> to vector<16x4xf32>
    %cst_7 = arith.constant dense<0xFF800000> : vector<16xf32>
    %7 = vector.multi_reduction <maximumf>, %6, %cst_7 [1] : vector<16x4xf32> to vector<16xf32>
    %8 = vector.shape_cast %7 : vector<16xf32> to vector<16x1xf32>
    %9 = vector.broadcast %8 : vector<16x1xf32> to vector<16x4xf32>
    %10 = arith.subf %6, %9 : vector<16x4xf32>
    %11 = math.exp %10 : vector<16x4xf32>
    %cst_8 = arith.constant dense<0.000000e+00> : vector<16xf32>
    %12 = vector.multi_reduction <add>, %11, %cst_8 [1] : vector<16x4xf32> to vector<16xf32>
    %13 = vector.shape_cast %12 : vector<16xf32> to vector<16x1xf32>
    %14 = tpu.reciprocal %13 {approx = true} : vector<16x1xf32> -> vector<16x1xf32>
    %15 = vector.broadcast %14 : vector<16x1xf32> to vector<16x4xf32>
    %16 = arith.mulf %11, %15 : vector<16x4xf32>
    %17 = vector.extract_strided_slice %16 {offsets = [0, 0], sizes = [16, 1], strides = [1, 1]} : vector<16x4xf32> to vector<16x1xf32>
    %18 = vector.extract_strided_slice %5 {offsets = [0, 0], sizes = [16, 64], strides = [1, 1]} : vector<16x260xf32> to vector<16x64xf32>
    %19 = vector.broadcast %17 : vector<16x1xf32> to vector<16x64xf32>
    %20 = arith.mulf %19, %18 : vector<16x64xf32>
    %21 = vector.extract_strided_slice %16 {offsets = [0, 1], sizes = [16, 1], strides = [1, 1]} : vector<16x4xf32> to vector<16x1xf32>
    %22 = vector.extract_strided_slice %5 {offsets = [0, 64], sizes = [16, 64], strides = [1, 1]} : vector<16x260xf32> to vector<16x64xf32>
    %23 = vector.broadcast %21 : vector<16x1xf32> to vector<16x64xf32>
    %24 = arith.mulf %23, %22 : vector<16x64xf32>
    %25 = arith.addf %20, %24 : vector<16x64xf32>
    %26 = vector.extract_strided_slice %16 {offsets = [0, 2], sizes = [16, 1], strides = [1, 1]} : vector<16x4xf32> to vector<16x1xf32>
    %27 = vector.extract_strided_slice %5 {offsets = [0, 128], sizes = [16, 64], strides = [1, 1]} : vector<16x260xf32> to vector<16x64xf32>
    %28 = vector.broadcast %26 : vector<16x1xf32> to vector<16x64xf32>
    %29 = arith.mulf %28, %27 : vector<16x64xf32>
    %30 = arith.addf %25, %29 : vector<16x64xf32>
    %31 = vector.extract_strided_slice %16 {offsets = [0, 3], sizes = [16, 1], strides = [1, 1]} : vector<16x4xf32> to vector<16x1xf32>
    %32 = vector.extract_strided_slice %5 {offsets = [0, 192], sizes = [16, 64], strides = [1, 1]} : vector<16x260xf32> to vector<16x64xf32>
    %33 = vector.broadcast %31 : vector<16x1xf32> to vector<16x64xf32>
    %34 = arith.mulf %33, %32 : vector<16x64xf32>
    %35 = arith.addf %30, %34 : vector<16x64xf32>
    %36 = arith.truncf %35 : vector<16x64xf32> to vector<16x64xbf16>
    %cst_9 = arith.constant dense<0.000000e+00> : vector<16x64xf32>
    %37 = tpu.matmul %0, %36, %cst_9 {dimension_numbers = #tpu.dot_dimension_numbers<[1], [0], [0], [1], [0, 0, 1, 1], [], []>} : vector<16x16xbf16>, vector<16x64xbf16>, vector<16x64xf32> -> vector<16x64xf32>
    %38 = vector.broadcast %4 : vector<1x64xf32> to vector<16x64xf32>
    %39 = arith.addf %37, %38 : vector<16x64xf32>
    %40 = arith.truncf %39 : vector<16x64xf32> to vector<16x64xbf16>
    %c0_10 = arith.constant 0 : index
    %c0_11 = arith.constant 0 : index
    %41 = vector.load %arg5[%c0_10, %c0_11] : memref<64x260xbf16, #tpu.memory_space<vmem>>, vector<64x260xbf16>
    %c0_12 = arith.constant 0 : index
    %c0_13 = arith.constant 0 : index
    %42 = vector.load %arg6[%c0_12, %c0_13] : memref<1x64xf32, #tpu.memory_space<vmem>>, vector<1x64xf32>
    %cst_14 = arith.constant dense<0.000000e+00> : vector<16x260xf32>
    %43 = tpu.matmul %40, %41, %cst_14 {dimension_numbers = #tpu.dot_dimension_numbers<[1], [0], [0], [1], [0, 0, 1, 1], [], []>} : vector<16x64xbf16>, vector<64x260xbf16>, vector<16x260xf32> -> vector<16x260xf32>
    %44 = vector.extract_strided_slice %43 {offsets = [0, 256], sizes = [16, 4], strides = [1, 1]} : vector<16x260xf32> to vector<16x4xf32>
    %cst_15 = arith.constant dense<0xFF800000> : vector<16xf32>
    %45 = vector.multi_reduction <maximumf>, %44, %cst_15 [1] : vector<16x4xf32> to vector<16xf32>
    %46 = vector.shape_cast %45 : vector<16xf32> to vector<16x1xf32>
    %47 = vector.broadcast %46 : vector<16x1xf32> to vector<16x4xf32>
    %48 = arith.subf %44, %47 : vector<16x4xf32>
    %49 = math.exp %48 : vector<16x4xf32>
    %cst_16 = arith.constant dense<0.000000e+00> : vector<16xf32>
    %50 = vector.multi_reduction <add>, %49, %cst_16 [1] : vector<16x4xf32> to vector<16xf32>
    %51 = vector.shape_cast %50 : vector<16xf32> to vector<16x1xf32>
    %52 = tpu.reciprocal %51 {approx = true} : vector<16x1xf32> -> vector<16x1xf32>
    %53 = vector.broadcast %52 : vector<16x1xf32> to vector<16x4xf32>
    %54 = arith.mulf %49, %53 : vector<16x4xf32>
    %55 = vector.extract_strided_slice %54 {offsets = [0, 0], sizes = [16, 1], strides = [1, 1]} : vector<16x4xf32> to vector<16x1xf32>
    %56 = vector.extract_strided_slice %43 {offsets = [0, 0], sizes = [16, 64], strides = [1, 1]} : vector<16x260xf32> to vector<16x64xf32>
    %57 = vector.broadcast %55 : vector<16x1xf32> to vector<16x64xf32>
    %58 = arith.mulf %57, %56 : vector<16x64xf32>
    %59 = vector.extract_strided_slice %54 {offsets = [0, 1], sizes = [16, 1], strides = [1, 1]} : vector<16x4xf32> to vector<16x1xf32>
    %60 = vector.extract_strided_slice %43 {offsets = [0, 64], sizes = [16, 64], strides = [1, 1]} : vector<16x260xf32> to vector<16x64xf32>
    %61 = vector.broadcast %59 : vector<16x1xf32> to vector<16x64xf32>
    %62 = arith.mulf %61, %60 : vector<16x64xf32>
    %63 = arith.addf %58, %62 : vector<16x64xf32>
    %64 = vector.extract_strided_slice %54 {offsets = [0, 2], sizes = [16, 1], strides = [1, 1]} : vector<16x4xf32> to vector<16x1xf32>
    %65 = vector.extract_strided_slice %43 {offsets = [0, 128], sizes = [16, 64], strides = [1, 1]} : vector<16x260xf32> to vector<16x64xf32>
    %66 = vector.broadcast %64 : vector<16x1xf32> to vector<16x64xf32>
    %67 = arith.mulf %66, %65 : vector<16x64xf32>
    %68 = arith.addf %63, %67 : vector<16x64xf32>
    %69 = vector.extract_strided_slice %54 {offsets = [0, 3], sizes = [16, 1], strides = [1, 1]} : vector<16x4xf32> to vector<16x1xf32>
    %70 = vector.extract_strided_slice %43 {offsets = [0, 192], sizes = [16, 64], strides = [1, 1]} : vector<16x260xf32> to vector<16x64xf32>
    %71 = vector.broadcast %69 : vector<16x1xf32> to vector<16x64xf32>
    %72 = arith.mulf %71, %70 : vector<16x64xf32>
    %73 = arith.addf %68, %72 : vector<16x64xf32>
    %74 = arith.truncf %73 : vector<16x64xf32> to vector<16x64xbf16>
    %cst_17 = arith.constant dense<0.000000e+00> : vector<16x64xf32>
    %75 = tpu.matmul %0, %74, %cst_17 {dimension_numbers = #tpu.dot_dimension_numbers<[1], [0], [0], [1], [0, 0, 1, 1], [], []>} : vector<16x16xbf16>, vector<16x64xbf16>, vector<16x64xf32> -> vector<16x64xf32>
    %76 = vector.broadcast %42 : vector<1x64xf32> to vector<16x64xf32>
    %77 = arith.addf %75, %76 : vector<16x64xf32>
    %78 = arith.truncf %77 : vector<16x64xf32> to vector<16x64xbf16>
    %c0_18 = arith.constant 0 : index
    %c0_19 = arith.constant 0 : index
    %79 = vector.load %arg7[%c0_18, %c0_19] : memref<64x132xbf16, #tpu.memory_space<vmem>>, vector<64x132xbf16>
    %c0_20 = arith.constant 0 : index
    %c0_21 = arith.constant 0 : index
    %80 = vector.load %arg8[%c0_20, %c0_21] : memref<1x32xf32, #tpu.memory_space<vmem>>, vector<1x32xf32>
    %cst_22 = arith.constant dense<0.000000e+00> : vector<16x132xf32>
    %81 = tpu.matmul %78, %79, %cst_22 {dimension_numbers = #tpu.dot_dimension_numbers<[1], [0], [0], [1], [0, 0, 1, 1], [], []>} : vector<16x64xbf16>, vector<64x132xbf16>, vector<16x132xf32> -> vector<16x132xf32>
    %82 = vector.extract_strided_slice %81 {offsets = [0, 128], sizes = [16, 4], strides = [1, 1]} : vector<16x132xf32> to vector<16x4xf32>
    %cst_23 = arith.constant dense<0xFF800000> : vector<16xf32>
    %83 = vector.multi_reduction <maximumf>, %82, %cst_23 [1] : vector<16x4xf32> to vector<16xf32>
    %84 = vector.shape_cast %83 : vector<16xf32> to vector<16x1xf32>
    %85 = vector.broadcast %84 : vector<16x1xf32> to vector<16x4xf32>
    %86 = arith.subf %82, %85 : vector<16x4xf32>
    %87 = math.exp %86 : vector<16x4xf32>
    %cst_24 = arith.constant dense<0.000000e+00> : vector<16xf32>
    %88 = vector.multi_reduction <add>, %87, %cst_24 [1] : vector<16x4xf32> to vector<16xf32>
    %89 = vector.shape_cast %88 : vector<16xf32> to vector<16x1xf32>
    %90 = tpu.reciprocal %89 {approx = true} : vector<16x1xf32> -> vector<16x1xf32>
    %91 = vector.broadcast %90 : vector<16x1xf32> to vector<16x4xf32>
    %92 = arith.mulf %87, %91 : vector<16x4xf32>
    %93 = vector.extract_strided_slice %92 {offsets = [0, 0], sizes = [16, 1], strides = [1, 1]} : vector<16x4xf32> to vector<16x1xf32>
    %94 = vector.extract_strided_slice %81 {offsets = [0, 0], sizes = [16, 32], strides = [1, 1]} : vector<16x132xf32> to vector<16x32xf32>
    %95 = vector.broadcast %93 : vector<16x1xf32> to vector<16x32xf32>
    %96 = arith.mulf %95, %94 : vector<16x32xf32>
    %97 = vector.extract_strided_slice %92 {offsets = [0, 1], sizes = [16, 1], strides = [1, 1]} : vector<16x4xf32> to vector<16x1xf32>
    %98 = vector.extract_strided_slice %81 {offsets = [0, 32], sizes = [16, 32], strides = [1, 1]} : vector<16x132xf32> to vector<16x32xf32>
    %99 = vector.broadcast %97 : vector<16x1xf32> to vector<16x32xf32>
    %100 = arith.mulf %99, %98 : vector<16x32xf32>
    %101 = arith.addf %96, %100 : vector<16x32xf32>
    %102 = vector.extract_strided_slice %92 {offsets = [0, 2], sizes = [16, 1], strides = [1, 1]} : vector<16x4xf32> to vector<16x1xf32>
    %103 = vector.extract_strided_slice %81 {offsets = [0, 64], sizes = [16, 32], strides = [1, 1]} : vector<16x132xf32> to vector<16x32xf32>
    %104 = vector.broadcast %102 : vector<16x1xf32> to vector<16x32xf32>
    %105 = arith.mulf %104, %103 : vector<16x32xf32>
    %106 = arith.addf %101, %105 : vector<16x32xf32>
    %107 = vector.extract_strided_slice %92 {offsets = [0, 3], sizes = [16, 1], strides = [1, 1]} : vector<16x4xf32> to vector<16x1xf32>
    %108 = vector.extract_strided_slice %81 {offsets = [0, 96], sizes = [16, 32], strides = [1, 1]} : vector<16x132xf32> to vector<16x32xf32>
    %109 = vector.broadcast %107 : vector<16x1xf32> to vector<16x32xf32>
    %110 = arith.mulf %109, %108 : vector<16x32xf32>
    %111 = arith.addf %106, %110 : vector<16x32xf32>
    %112 = arith.truncf %111 : vector<16x32xf32> to vector<16x32xbf16>
    %cst_25 = arith.constant dense<0.000000e+00> : vector<16x32xf32>
    %113 = tpu.matmul %0, %112, %cst_25 {dimension_numbers = #tpu.dot_dimension_numbers<[1], [0], [0], [1], [0, 0, 1, 1], [], []>} : vector<16x16xbf16>, vector<16x32xbf16>, vector<16x32xf32> -> vector<16x32xf32>
    %114 = vector.broadcast %80 : vector<1x32xf32> to vector<16x32xf32>
    %115 = arith.addf %113, %114 : vector<16x32xf32>
    %116 = arith.truncf %115 : vector<16x32xf32> to vector<16x32xbf16>
    %c0_26 = arith.constant 0 : index
    %c0_27 = arith.constant 0 : index
    %117 = vector.load %arg11[%c0_26, %c0_27] : memref<16x16xbf16, #tpu.memory_space<vmem>>, vector<16x16xbf16>
    %cst_28 = arith.constant dense<0.000000e+00> : vector<16x32xf32>
    %118 = tpu.matmul %117, %116, %cst_28 {dimension_numbers = #tpu.dot_dimension_numbers<[1], [0], [0], [1], [0, 0, 1, 1], [], []>} : vector<16x16xbf16>, vector<16x32xbf16>, vector<16x32xf32> -> vector<16x32xf32>
    %119 = vector.extract_strided_slice %118 {offsets = [0, 0], sizes = [8, 32], strides = [1, 1]} : vector<16x32xf32> to vector<8x32xf32>
    %120 = vector.extract_strided_slice %118 {offsets = [8, 0], sizes = [8, 32], strides = [1, 1]} : vector<16x32xf32> to vector<8x32xf32>
    %121 = arith.mulf %119, %120 : vector<8x32xf32>
    %c0_29 = arith.constant 0 : index
    %c0_30 = arith.constant 0 : index
    %122 = vector.load %arg9[%c0_29, %c0_30] : memref<1x32xf32, #tpu.memory_space<vmem>>, vector<1x32xf32>
    %123 = vector.broadcast %122 : vector<1x32xf32> to vector<8x32xf32>
    %124 = arith.mulf %121, %123 : vector<8x32xf32>
    %cst_31 = arith.constant dense<0.000000e+00> : vector<8xf32>
    %125 = vector.multi_reduction <add>, %124, %cst_31 [1] : vector<8x32xf32> to vector<8xf32>
    %126 = vector.shape_cast %125 : vector<8xf32> to vector<8x1xf32>
    %c0_32 = arith.constant 0 : index
    %c0_33 = arith.constant 0 : index
    %127 = vector.load %arg10[%c0_32, %c0_33] : memref<1x1xf32, #tpu.memory_space<vmem>>, vector<1x1xf32>
    %128 = vector.broadcast %127 : vector<1x1xf32> to vector<8x1xf32>
    %129 = arith.addf %126, %128 : vector<8x1xf32>
    %cst_34 = arith.constant 0.000000e+00 : f32
    %130 = vector.broadcast %cst_34 : f32 to vector<16x128xf32>
    %c0_35 = arith.constant 0 : index
    %c0_36 = arith.constant 0 : index
    %131 = vector.load %arg12[%c0_35, %c0_36] : memref<16x128xf32, #tpu.memory_space<vmem>>, vector<16x128xf32>
    tpu.vector_store %arg12[%c0_35, %c0_36], %130 {strides = array<i32>} : memref<16x128xf32, #tpu.memory_space<vmem>>, vector<16x128xf32>,
    %c0_37 = arith.constant 0 : index
    %c0_38 = arith.constant 0 : index
    %132 = vector.load %arg12[%c0_37, %c0_38] : memref<16x128xf32, #tpu.memory_space<vmem>>, vector<16x32xf32>
    tpu.vector_store %arg12[%c0_37, %c0_38], %115 {strides = array<i32>} : memref<16x128xf32, #tpu.memory_space<vmem>>, vector<16x32xf32>,
    %c0_39 = arith.constant 0 : index
    %c32 = arith.constant 32 : index
    %133 = vector.load %arg12[%c0_39, %c32] : memref<16x128xf32, #tpu.memory_space<vmem>>, vector<16x4xf32>
    tpu.vector_store %arg12[%c0_39, %c32], %6 {strides = array<i32>} : memref<16x128xf32, #tpu.memory_space<vmem>>, vector<16x4xf32>,
    %c0_40 = arith.constant 0 : index
    %c36 = arith.constant 36 : index
    %134 = vector.load %arg12[%c0_40, %c36] : memref<16x128xf32, #tpu.memory_space<vmem>>, vector<16x4xf32>
    tpu.vector_store %arg12[%c0_40, %c36], %44 {strides = array<i32>} : memref<16x128xf32, #tpu.memory_space<vmem>>, vector<16x4xf32>,
    %c0_41 = arith.constant 0 : index
    %c40 = arith.constant 40 : index
    %135 = vector.load %arg12[%c0_41, %c40] : memref<16x128xf32, #tpu.memory_space<vmem>>, vector<16x4xf32>
    tpu.vector_store %arg12[%c0_41, %c40], %82 {strides = array<i32>} : memref<16x128xf32, #tpu.memory_space<vmem>>, vector<16x4xf32>,
    %c0_42 = arith.constant 0 : index
    %c44 = arith.constant 44 : index
    %136 = vector.load %arg12[%c0_42, %c44] : memref<16x128xf32, #tpu.memory_space<vmem>>, vector<8x1xf32>
    tpu.vector_store %arg12[%c0_42, %c44], %129 {strides = array<i32>} : memref<16x128xf32, #tpu.memory_space<vmem>>, vector<8x1xf32>,
    return
  }
  func.func @transform_0(%arg0: i32) -> (i32, i32) {
    %c0_i32 = arith.constant 0 : i32
    %c0_i32_0 = arith.constant 0 : i32
    %c0_i32_1 = arith.constant 0 : i32
    return %c0_i32, %c0_i32_0 : i32, i32
  }
  func.func @transform_1(%arg0: i32) -> (i32, i32) {
    %c0_i32 = arith.constant 0 : i32
    %c0_i32_0 = arith.constant 0 : i32
    %c0_i32_1 = arith.constant 0 : i32
    return %c0_i32, %c0_i32_0 : i32, i32
  }
  func.func @transform_2(%arg0: i32) -> (i32, i32) {
    %c0_i32 = arith.constant 0 : i32
    %c0_i32_0 = arith.constant 0 : i32
    %c0_i32_1 = arith.constant 0 : i32
    return %c0_i32, %c0_i32_0 : i32, i32
  }
  func.func @transform_3(%arg0: i32) -> (i32, i32) {
    %c0_i32 = arith.constant 0 : i32
    %c0_i32_0 = arith.constant 0 : i32
    %c0_i32_1 = arith.constant 0 : i32
    return %c0_i32, %c0_i32_0 : i32, i32
  }
  func.func @transform_4(%arg0: i32) -> (i32, i32) {
    %c0_i32 = arith.constant 0 : i32
    %c0_i32_0 = arith.constant 0 : i32
    %c0_i32_1 = arith.constant 0 : i32
    return %c0_i32, %c0_i32_0 : i32, i32
  }
  func.func @transform_5(%arg0: i32) -> (i32, i32) {
    %c0_i32 = arith.constant 0 : i32
    %c0_i32_0 = arith.constant 0 : i32
    %c0_i32_1 = arith.constant 0 : i32
    return %c0_i32, %c0_i32_0 : i32, i32
  }
  func.func @transform_6(%arg0: i32) -> (i32, i32) {
    %c0_i32 = arith.constant 0 : i32
    %c0_i32_0 = arith.constant 0 : i32
    %c0_i32_1 = arith.constant 0 : i32
    return %c0_i32, %c0_i32_0 : i32, i32
  }
  func.func @transform_7(%arg0: i32) -> (i32, i32) {
    %c0_i32 = arith.constant 0 : i32
    %c0_i32_0 = arith.constant 0 : i32
    %c0_i32_1 = arith.constant 0 : i32
    return %c0_i32, %c0_i32_0 : i32, i32
  }
  func.func @transform_8(%arg0: i32) -> (i32, i32) {
    %c0_i32 = arith.constant 0 : i32
    %c0_i32_0 = arith.constant 0 : i32
    %c0_i32_1 = arith.constant 0 : i32
    return %c0_i32, %c0_i32_0 : i32, i32
  }
  func.func @transform_9(%arg0: i32) -> (i32, i32) {
    %c0_i32 = arith.constant 0 : i32
    %c0_i32_0 = arith.constant 0 : i32
    %c0_i32_1 = arith.constant 0 : i32
    return %c0_i32, %c0_i32_0 : i32, i32
  }
  func.func @transform_10(%arg0: i32) -> (i32, i32) {
    %c0_i32 = arith.constant 0 : i32
    %c0_i32_0 = arith.constant 0 : i32
    %c0_i32_1 = arith.constant 0 : i32
    return %c0_i32, %c0_i32_0 : i32, i32
  }
  func.func @transform_11(%arg0: i32) -> (i32, i32) {
    %c0_i32 = arith.constant 0 : i32
    %c0_i32_0 = arith.constant 0 : i32
    %c0_i32_1 = arith.constant 0 : i32
    return %c0_i32, %c0_i32_0 : i32, i32
  }
}

</mosaic_0001>

<llo_original>
// kernel: gcn_m_forward.1
$region0: #{gcn_m_forward.1}
  #allocation0 [shape = 'u32[]', space=smem, size = 0x4, offset = 0x4, fixed_abs, tag = 'smem constant byte address 0x4 - core index']
  #allocation1 [shape = 'u32[144,128]{1,0:T(1,128)}', space=vmem, size = 0x12000, scoped, tag = 'internal scratch']
  #allocation2 [shape = 'f32[1,1]{1,0:T(1,128)S(1)}', space=vmem, size = 0x200, scoped, tag = 'scoped memory for gcn_m_forward.1']
  %s0 = inlined_call_operand.hbm [shape: f32[16,32], index: 0, kind: input, shape index: {}]
  %s1 = inlined_call_operand.vmem [shape: bf16[16,16], index: 1, kind: input, shape index: {}]
  %s2 = inlined_call_operand.hbm [shape: bf16[32,260], index: 2, kind: input, shape index: {}]
  %s3 = inlined_call_operand.vmem [shape: f32[1,64], index: 3, kind: input, shape index: {}]
  %s4 = inlined_call_operand.hbm [shape: bf16[64,260], index: 4, kind: input, shape index: {}]
  %s5 = inlined_call_operand.vmem [shape: f32[1,64], index: 5, kind: input, shape index: {}]
  %s6 = inlined_call_operand.hbm [shape: bf16[64,132], index: 6, kind: input, shape index: {}]
  %s7 = inlined_call_operand.vmem [shape: f32[1,32], index: 7, kind: input, shape index: {}]
  %s8 = inlined_call_operand.vmem [shape: f32[1,32], index: 8, kind: input, shape index: {}]
  %s9 = inlined_call_operand.<no memory space> [shape: f32[1,1], index: 9, kind: input, shape index: {}]
  %s10 = inlined_call_operand.hbm [shape: bf16[16,16], index: 10, kind: input, shape index: {}]
  %s11 = inlined_call_operand.vmem [shape: f32[16,128], index: 11, kind: output, shape index: {}]
  %s12 = sld [smem:[#allocation0]]
  $region74: #{gcn_m_forward.1} parent=0
    _
  %s14 = ssub.s32 1, %s12
  %s15 = scalar_select 0, %s14, %s12
  %v16 = vstv %s9
  %17 = vst [vmem:[#allocation2] sm:$0x1] %v16
  $region1: #{gcn_m_forward.1} parent=0
    #allocation3 [shape = 'u8[8192]{0}', space=vmem, size = 0x2000, scoped, tag = 'input window, operand 0, single buffered']
    #allocation4 [shape = 's32[1]{0}', space=sflag, size = 0x4, scoped, tag = 'scoped memory for gcn_m_forward.1']
    #allocation5 [shape = 'u8[24576]{0}', space=vmem, size = 0x6000, scoped, tag = 'input window, operand 2, single buffered']
    #allocation6 [shape = 's32[1]{0}', space=sflag, size = 0x4, scoped, tag = 'scoped memory for gcn_m_forward.1']
    #allocation7 [shape = 'u8[49152]{0}', space=vmem, size = 0xc000, scoped, tag = 'input window, operand 4, single buffered']
    #allocation8 [shape = 'u8[32768]{0}', space=vmem, size = 0x8000, scoped, tag = 'input window, operand 6, single buffered']
    #allocation9 [shape = 's32[1]{0}', space=sflag, size = 0x4, scoped, tag = 'scoped memory for gcn_m_forward.1']
    #allocation10 [shape = 'u8[4096]{0}', space=vmem, size = 0x1000, scoped, tag = 'input window, operand 10, single buffered']
    %18 = vsyncpa [#allocation4], 0
    %19 = vsyncpa [#allocation6], 0
    %20 = vsyncpa [#allocation9], 0
    // Predicated region
    $region2: #{gcn_m_forward.1} parent=1 // pred_check
      _
    $region3: #{gcn_m_forward.1} parent=1 // pred_check_branch
      %22 = sbr.rel (0) target = $region5
    $region4: #{gcn_m_forward.1} parent=1 // pred_region
      %s24 = ssub.s32 256, 256
      %25 = vsyncadd [#allocation4], %s24
      %s26 = sshll.u32 [#allocation3], 4
      %s27 = int_to_ptr.vmem [resolvable:$true] %s26
      %32 = dma.hbm_to_vmem [thread:$0]  %s0, 256, %s27, [#allocation4], 128, 128, 8
    $region5: #{gcn_m_forward.1} parent=1 // pred_fallthru
      _
    // Predicated region
    $region6: #{gcn_m_forward.1} parent=1 // pred_check
      _
    $region7: #{gcn_m_forward.1} parent=1 // pred_check_branch
      %34 = sbr.rel (0) target = $region9
    $region8: #{gcn_m_forward.1} parent=1 // pred_region
      _
    $region9: #{gcn_m_forward.1} parent=1 // pred_fallthru
      _
    // Predicated region
    $region10: #{gcn_m_forward.1} parent=1 // pred_check
      _
    $region11: #{gcn_m_forward.1} parent=1 // pred_check_branch
      %36 = sbr.rel (0) target = $region13
    $region12: #{gcn_m_forward.1} parent=1 // pred_region
      %s38 = ssub.s32 768, 768
      %39 = vsyncadd [#allocation6], %s38
      %s40 = sshll.u32 [#allocation5], 4
      %s41 = int_to_ptr.vmem [resolvable:$true] %s40
      %46 = dma.hbm_to_vmem [thread:$0]  %s2, 768, %s41, [#allocation6], 192, 192, 12
    $region13: #{gcn_m_forward.1} parent=1 // pred_fallthru
      _
    // Predicated region
    $region14: #{gcn_m_forward.1} parent=1 // pred_check
      _
    $region15: #{gcn_m_forward.1} parent=1 // pred_check_branch
      %48 = sbr.rel (0) target = $region17
    $region16: #{gcn_m_forward.1} parent=1 // pred_region
      _
    $region17: #{gcn_m_forward.1} parent=1 // pred_fallthru
      _
    // Predicated region
    $region18: #{gcn_m_forward.1} parent=1 // pred_check
      _
    $region19: #{gcn_m_forward.1} parent=1 // pred_check_branch
      %50 = sbr.rel (0) target = $region21
    $region20: #{gcn_m_forward.1} parent=1 // pred_region
      %s52 = ssub.s32 1536, 1536
      %53 = vsyncadd [#allocation6], %s52
      %s54 = sshll.u32 [#allocation7], 4
      %s55 = int_to_ptr.vmem [resolvable:$true] %s54
      %60 = dma.hbm_to_vmem [thread:$0]  %s4, 1536, %s55, [#allocation6], 192, 192, 12
    $region21: #{gcn_m_forward.1} parent=1 // pred_fallthru
      _
    // Predicated region
    $region22: #{gcn_m_forward.1} parent=1 // pred_check
      _
    $region23: #{gcn_m_forward.1} parent=1 // pred_check_branch
      %62 = sbr.rel (0) target = $region25
    $region24: #{gcn_m_forward.1} parent=1 // pred_region
      _
    $region25: #{gcn_m_forward.1} parent=1 // pred_fallthru
      _
    // Predicated region
    $region26: #{gcn_m_forward.1} parent=1 // pred_check
      _
    $region27: #{gcn_m_forward.1} parent=1 // pred_check_branch
      %64 = sbr.rel (0) target = $region29
    $region28: #{gcn_m_forward.1} parent=1 // pred_region
      %s66 = ssub.s32 1024, 1024
      %67 = vsyncadd [#allocation9], %s66
      %s68 = sshll.u32 [#allocation8], 4
      %s69 = int_to_ptr.vmem [resolvable:$true] %s68
      %74 = dma.hbm_to_vmem [thread:$0]  %s6, 1024, %s69, [#allocation9], 128, 128, 8
    $region29: #{gcn_m_forward.1} parent=1 // pred_fallthru
      _
    // Predicated region
    $region30: #{gcn_m_forward.1} parent=1 // pred_check
      _
    $region31: #{gcn_m_forward.1} parent=1 // pred_check_branch
      %76 = sbr.rel (0) target = $region33
    $region32: #{gcn_m_forward.1} parent=1 // pred_region
      _
    $region33: #{gcn_m_forward.1} parent=1 // pred_fallthru
      _
    // Predicated region
    $region34: #{gcn_m_forward.1} parent=1 // pred_check
      _
    $region35: #{gcn_m_forward.1} parent=1 // pred_check_branch
      %78 = sbr.rel (0) target = $region37
    $region36: #{gcn_m_forward.1} parent=1 // pred_region
      _
    $region37: #{gcn_m_forward.1} parent=1 // pred_fallthru
      _
    // Predicated region
    $region38: #{gcn_m_forward.1} parent=1 // pred_check
      _
    $region39: #{gcn_m_forward.1} parent=1 // pred_check_branch
      %80 = sbr.rel (0) target = $region41
    $region40: #{gcn_m_forward.1} parent=1 // pred_region
      _
    $region41: #{gcn_m_forward.1} parent=1 // pred_fallthru
      _
    // Predicated region
    $region42: #{gcn_m_forward.1} parent=1 // pred_check
      _
    $region43: #{gcn_m_forward.1} parent=1 // pred_check_branch
      %82 = sbr.rel (0) target = $region45
    $region44: #{gcn_m_forward.1} parent=1 // pred_region
      %s84 = ssub.s32 128, 128
      %85 = vsyncadd [#allocation9], %s84
      %s86 = sshll.u32 [#allocation10], 4
      %s87 = int_to_ptr.vmem [resolvable:$true] %s86
      %92 = dma.hbm_to_vmem [thread:$0]  %s10, 128, %s87, [#allocation9], 64, 64, 4
    $region45: #{gcn_m_forward.1} parent=1 // pred_fallthru
      _
    // Predicated region
    $region46: #{gcn_m_forward.1} parent=1 // pred_check
      _
    $region47: #{gcn_m_forward.1} parent=1 // pred_check_branch
      %94 = sbr.rel (0) target = $region49
    $region48: #{gcn_m_forward.1} parent=1 // pred_region
      %95 = dma.done [#allocation4], 256
    $region49: #{gcn_m_forward.1} parent=1 // pred_fallthru
      _
    // Predicated region
    $region50: #{gcn_m_forward.1} parent=1 // pred_check
      _
    $region51: #{gcn_m_forward.1} parent=1 // pred_check_branch
      %97 = sbr.rel (0) target = $region53
    $region52: #{gcn_m_forward.1} parent=1 // pred_region
      %98 = dma.done [#allocation6], 768
    $region53: #{gcn_m_forward.1} parent=1 // pred_fallthru
      _
    // Predicated region
    $region54: #{gcn_m_forward.1} parent=1 // pred_check
      _
    $region55: #{gcn_m_forward.1} parent=1 // pred_check_branch
      %100 = sbr.rel (0) target = $region57
    $region56: #{gcn_m_forward.1} parent=1 // pred_region
      %101 = dma.done [#allocation6], 1536
    $region57: #{gcn_m_forward.1} parent=1 // pred_fallthru
      _
    // Predicated region
    $region58: #{gcn_m_forward.1} parent=1 // pred_check
      _
    $region59: #{gcn_m_forward.1} parent=1 // pred_check_branch
      %103 = sbr.rel (0) target = $region61
    $region60: #{gcn_m_forward.1} parent=1 // pred_region
      %104 = dma.done [#allocation9], 1024
    $region61: #{gcn_m_forward.1} parent=1 // pred_fallthru
      _
    // Predicated region
    $region62: #{gcn_m_forward.1} parent=1 // pred_check
      _
    $region63: #{gcn_m_forward.1} parent=1 // pred_check_branch
      %106 = sbr.rel (0) target = $region65
    $region64: #{gcn_m_forward.1} parent=1 // pred_region
      %107 = dma.done [#allocation9], 128
    $region65: #{gcn_m_forward.1} parent=1 // pred_fallthru
      _
    %v109 = vld [vmem:[%s1] sm:$0xf]
    %v110 = vld [vmem:[%s1 + $0x4] sm:$0xf]
    %v111 = vld [vmem:[#allocation3] sm:$0xff]
    %v112 = vld [vmem:[#allocation3 + $0x8] sm:$0xff]
    %v113 = vpack.c.bf16 %v112, %v111
    %v114 = vld [vmem:[#allocation5] sm:$0xff]
    %v115 = vld [vmem:[#allocation5 + $0x8] sm:$0xf]
    %v116 = vld [vmem:[#allocation5 + $0xc] sm:$0xff]
    %v117 = vld [vmem:[#allocation5 + $0x14] sm:$0xf]
    %v118 = vld [vmem:[#allocation5 + $0x18] sm:$0xff]
    %v119 = vld [vmem:[#allocation5 + $0x20] sm:$0xf]
    %v120 = vld [vmem:[#allocation5 + $0x24] sm:$0xff]
    %v121 = vld [vmem:[#allocation5 + $0x2c] sm:$0xf]
    %v122 = vld [vmem:[%s3] sm:$0x1]
    %v131 = vunpack.c.l.b16 %v114
    %v132 = vunpack.c.h.b16 %v114
    %v133 = vunpack.c.l.b16 %v115
    %v134 = vunpack.c.l.b16 %v116
    %v135 = vunpack.c.h.b16 %v116
    %v136 = vunpack.c.l.b16 %v117
    %v137 = vunpack.c.l.b16 %v118
    %v138 = vunpack.c.h.b16 %v118
    %v139 = vunpack.c.l.b16 %v119
    %v140 = vunpack.c.l.b16 %v120
    %v141 = vunpack.c.h.b16 %v120
    %v142 = vunpack.c.l.b16 %v121
    %v143 = vpack.c.b16 %v134, %v131
    %v144 = vpack.c.b16 %v135, %v132
    %v145 = vpack.c.b16 %v136, %v133
    %v146 = vpack.c.b16 %v140, %v137
    %v147 = vpack.c.b16 %v141, %v138
    %v148 = vpack.c.b16 %v142, %v139
    %vm155 = vcmask 261120
    %v157 = vsel %vm155, %v113, 0
    %159 = vmatprep.subr.bf16.mxu0 %v144
    %160 = vmatpush1.bf16.msra.mxu0 %v143
    %161 = vmatprep.subr.bf16.mxu0 %v147
    %162 = vmatpush1.bf16.msra.mxu0 %v146
    %163 = vmatprep.subr.bf16.mxu0 0
    %164 = vmatpush1.bf16.msra.mxu0 0
    %165 = vmatprep.subr.bf16.mxu0 0
    %166 = vmatpush1.bf16.msra.mxu0 0
    %167 = vmatprep.subr.bf16.mxu0 0
    %168 = vmatpush1.bf16.msra.mxu0 0
    %169 = vmatprep.subr.bf16.mxu0 0
    %170 = vmatpush1.bf16.msra.mxu0 0
    %171 = vmatprep.subr.bf16.mxu0 0
    %172 = vmatpush1.bf16.msra.mxu0 0
    %173 = vmatprep.subr.bf16.mxu0 0
    %174 = vmatpush1.bf16.msra.mxu0 0
    %175 = vmatprep.subr.bf16.mxu0 0
    %176 = vmatpush1.bf16.msra.mxu0 0
    %177 = vmatprep.subr.bf16.mxu0 0
    %178 = vmatpush1.bf16.msra.mxu0 0
    %179 = vmatprep.subr.bf16.mxu0 0
    %180 = vmatpush1.bf16.msra.mxu0 0
    %181 = vmatprep.subr.bf16.mxu0 0
    %182 = vmatpush1.bf16.msra.mxu0 0
    %183 = vmatprep.subr.bf16.mxu0 0
    %184 = vmatpush1.bf16.msra.mxu0 0
    %185 = vmatprep.subr.bf16.mxu0 0
    %186 = vmatpush1.bf16.msra.mxu0 0
    %187 = vmatprep.subr.bf16.mxu0 0
    %188 = vmatpush1.bf16.msra.mxu0 0
    %189 = vmatprep.subr.bf16.mxu0 0
    %190 = vmatpush1.bf16.msra.mxu0 0
    %191 = vmatprep.mubr.bf16.mxu0 0
    %192 = vmatmul.mubr.bf16.gmra.mrb[0].mxu0 %v157
    %v193 = vpop.f32.mrb[0].mxu0
    %v194 = vadd.f32 0.0, %v193
    %v195 = vpop.f32.mrb[0].mxu0
    %v196 = vadd.f32 0.0, %v195
    %v197 = vpop.f32.mrb[0].mxu0
    %v198 = vadd.f32 0.0, %v197
    %v199 = vpop.f32.mrb[0].mxu0
    %v200 = vadd.f32 0.0, %v199
    %201 = vdwg.mxu0
    %202 = vmatprep.subr.bf16.mxu0 0
    %203 = vmatpush1.bf16.msra.mxu0 %v145
    %204 = vmatprep.subr.bf16.mxu0 0
    %205 = vmatpush1.bf16.msra.mxu0 %v148
    %206 = vmatprep.subr.bf16.mxu0 0
    %207 = vmatpush1.bf16.msra.mxu0 0
    %208 = vmatprep.subr.bf16.mxu0 0
    %209 = vmatpush1.bf16.msra.mxu0 0
    %210 = vmatprep.subr.bf16.mxu0 0
    %211 = vmatpush1.bf16.msra.mxu0 0
    %212 = vmatprep.subr.bf16.mxu0 0
    %213 = vmatpush1.bf16.msra.mxu0 0
    %214 = vmatprep.subr.bf16.mxu0 0
    %215 = vmatpush1.bf16.msra.mxu0 0
    %216 = vmatprep.subr.bf16.mxu0 0
    %217 = vmatpush1.bf16.msra.mxu0 0
    %218 = vmatprep.subr.bf16.mxu0 0
    %219 = vmatpush1.bf16.msra.mxu0 0
    %220 = vmatprep.subr.bf16.mxu0 0
    %221 = vmatpush1.bf16.msra.mxu0 0
    %222 = vmatprep.subr.bf16.mxu0 0
    %223 = vmatpush1.bf16.msra.mxu0 0
    %224 = vmatprep.subr.bf16.mxu0 0
    %225 = vmatpush1.bf16.msra.mxu0 0
    %226 = vmatprep.subr.bf16.mxu0 0
    %227 = vmatpush1.bf16.msra.mxu0 0
    %228 = vmatprep.subr.bf16.mxu0 0
    %229 = vmatpush1.bf16.msra.mxu0 0
    %230 = vmatprep.subr.bf16.mxu0 0
    %231 = vmatpush1.bf16.msra.mxu0 0
    %232 = vmatprep.subr.bf16.mxu0 0
    %233 = vmatpush1.bf16.msra.mxu0 0
    %234 = vmatprep.mubr.bf16.mxu0 0
    %235 = vmatmul.mubr.bf16.gmra.mrb[0].mxu0 %v157
    %v236 = vpop.f32.mrb[0].mxu0
    %v237 = vadd.f32 0.0, %v236
    %v238 = vpop.f32.mrb[0].mxu0
    %v239 = vpop.f32.mrb[0].mxu0
    %v240 = vadd.f32 0.0, %v239
    %v241 = vpop.f32.mrb[0].mxu0
    %242 = vdwg.mxu0
    %vm243 = vcmask 31744
    %v244 = vsel %vm243, %v237, -inf
    %245 = vmax.xlane.f32.xlu0 %v244
    %v246 = vpop.xlane.xlu0 %245
    %v247 = vsel %vm243, %v240, -inf
    %248 = vmax.xlane.f32.xlu0 %v247
    %v249 = vpop.xlane.xlu0 %248
    %v250 = vsub.f32 %v237, %v246
    %v251 = vsub.f32 %v240, %v249
    %v252 = vmul.f32 %v250, 1.442695
    %v253 = vpow.pop %v252
    %v254 = vmul.f32 %v251, 1.442695
    %v255 = vpow.pop %v254
    %v256 = vsel %vm243, %v253, 0.0
    %257 = vadd.xlane.f32.xlu0 %v256
    %v258 = vpop.xlane.xlu0 %257
    %v259 = vsel %vm243, %v255, 0.0
    %260 = vadd.xlane.f32.xlu0 %v259
    %v261 = vpop.xlane.xlu0 %260
    %v262 = vrcp.pop %v258
    %v263 = vrcp.pop %v261
    %v264 = vmul.f32 %v253, %v262
    %v265 = vmul.f32 %v255, %v263
    %267 = vset.pattern.permute.xlu0 0
    %268 = vperm.xlu0 %267, %v264
    %v269 = vpop.permute.xlu0 %268
    %272 = vset.pattern.permute.xlu0 0
    %273 = vperm.xlu0 %272, %v265
    %v274 = vpop.permute.xlu0 %273
    %v276 = vmul.f32 %v269, %v194
    %v277 = vmul.f32 %v274, %v198
    %278 = vset.pattern.permute.xlu0 1
    %279 = vperm.xlu0 %278, %v264
    %v280 = vpop.permute.xlu0 %279
    %282 = vset.pattern.permute.xlu0 1
    %283 = vperm.xlu0 %282, %v265
    %v284 = vpop.permute.xlu0 %283
    %v286 = vmul.f32 %v280, %v194
    %v287 = vmul.f32 %v284, %v198
    %290 = vrot.lane.b32.xlu0 %v286, 64
    %v291 = vpop.permute.xlu0 %290
    %292 = vrot.lane.b32.xlu0 %v287, 64
    %v293 = vpop.permute.xlu0 %292
    %v296 = vadd.f32 %v276, %v291
    %v297 = vadd.f32 %v277, %v293
    %298 = vset.pattern.permute.xlu0 2
    %299 = vperm.xlu0 %298, %v264
    %v300 = vpop.permute.xlu0 %299
    %302 = vset.pattern.permute.xlu0 2
    %303 = vperm.xlu0 %302, %v265
    %v304 = vpop.permute.xlu0 %303
    %v306 = vmul.f32 %v300, %v196
    %v307 = vmul.f32 %v304, %v200
    %v308 = vadd.f32 %v296, %v306
    %v309 = vadd.f32 %v297, %v307
    %310 = vset.pattern.permute.xlu0 3
    %311 = vperm.xlu0 %310, %v264
    %v312 = vpop.permute.xlu0 %311
    %314 = vset.pattern.permute.xlu0 3
    %315 = vperm.xlu0 %314, %v265
    %v316 = vpop.permute.xlu0 %315
    %v318 = vmul.f32 %v312, %v196
    %v319 = vmul.f32 %v316, %v200
    %322 = vrot.lane.b32.xlu0 %v318, 64
    %v323 = vpop.permute.xlu0 %322
    %324 = vrot.lane.b32.xlu0 %v319, 64
    %v325 = vpop.permute.xlu0 %324
    %v328 = vadd.f32 %v308, %v323
    %v329 = vadd.f32 %v309, %v325
    %v330 = vpack.c.bf16 %v329, %v328
    %v332 = vlaneseq
    %v333 = vshrl.u32 %v332, 7
    %v334 = vsub.s32 0, %v333
    %v335 = vrot.slane %v122, %v334
    %v339 = vunpack.c.l.b16 %v109
    %v340 = vunpack.c.l.b16 %v110
    %v341 = vpack.c.b16 %v340, %v339
    %vm342 = vcmask 130048
    %v344 = vsel %vm342, %v341, 0
    %346 = vmatprep.subr.bf16.mxu0 0
    %347 = vmatpush1.bf16.msra.mxu0 %v330
    %348 = vmatprep.subr.bf16.mxu0 0
    %349 = vmatpush1.bf16.msra.mxu0 0
    %350 = vmatprep.subr.bf16.mxu0 0
    %351 = vmatpush1.bf16.msra.mxu0 0
    %352 = vmatprep.subr.bf16.mxu0 0
    %353 = vmatpush1.bf16.msra.mxu0 0
    %354 = vmatprep.subr.bf16.mxu0 0
    %355 = vmatpush1.bf16.msra.mxu0 0
    %356 = vmatprep.subr.bf16.mxu0 0
    %357 = vmatpush1.bf16.msra.mxu0 0
    %358 = vmatprep.subr.bf16.mxu0 0
    %359 = vmatpush1.bf16.msra.mxu0 0
    %360 = vmatprep.subr.bf16.mxu0 0
    %361 = vmatpush1.bf16.msra.mxu0 0
    %362 = vmatprep.subr.bf16.mxu0 0
    %363 = vmatpush1.bf16.msra.mxu0 0
    %364 = vmatprep.subr.bf16.mxu0 0
    %365 = vmatpush1.bf16.msra.mxu0 0
    %366 = vmatprep.subr.bf16.mxu0 0
    %367 = vmatpush1.bf16.msra.mxu0 0
    %368 = vmatprep.subr.bf16.mxu0 0
    %369 = vmatpush1.bf16.msra.mxu0 0
    %370 = vmatprep.subr.bf16.mxu0 0
    %371 = vmatpush1.bf16.msra.mxu0 0
    %372 = vmatprep.subr.bf16.mxu0 0
    %373 = vmatpush1.bf16.msra.mxu0 0
    %374 = vmatprep.subr.bf16.mxu0 0
    %375 = vmatpush1.bf16.msra.mxu0 0
    %376 = vmatprep.subr.bf16.mxu0 0
    %377 = vmatpush1.bf16.msra.mxu0 0
    %378 = vmatprep.mubr.bf16.mxu0 0
    %379 = vmatmul.mubr.bf16.gmra.mrb[0].mxu0 %v344
    %v380 = vpop.f32.mrb[0].mxu0
    %v381 = vadd.f32 %v335, %v380
    %v382 = vpop.f32.mrb[0].mxu0
    %v383 = vpop.f32.mrb[0].mxu0
    %v384 = vadd.f32 %v335, %v383
    %v385 = vpop.f32.mrb[0].mxu0
    %386 = vdwg.mxu0
    %v387 = vpack.c.bf16 %v384, %v381
    %v388 = vld [vmem:[#allocation7] sm:$0xff]
    %v389 = vld [vmem:[#allocation7 + $0x8] sm:$0xf]
    %v390 = vld [vmem:[#allocation7 + $0xc] sm:$0xff]
    %v391 = vld [vmem:[#allocation7 + $0x14] sm:$0xf]
    %v392 = vld [vmem:[#allocation7 + $0x18] sm:$0xff]
    %v393 = vld [vmem:[#allocation7 + $0x20] sm:$0xf]
    %v394 = vld [vmem:[#allocation7 + $0x24] sm:$0xff]
    %v395 = vld [vmem:[#allocation7 + $0x2c] sm:$0xf]
    %v396 = vld [vmem:[#allocation7 + $0x30] sm:$0xff]
    %v397 = vld [vmem:[#allocation7 + $0x38] sm:$0xf]
    %v398 = vld [vmem:[#allocation7 + $0x3c] sm:$0xff]
    %v399 = vld [vmem:[#allocation7 + $0x44] sm:$0xf]
    %v400 = vld [vmem:[#allocation7 + $0x48] sm:$0xff]
    %v401 = vld [vmem:[#allocation7 + $0x50] sm:$0xf]
    %v402 = vld [vmem:[#allocation7 + $0x54] sm:$0xff]
    %v403 = vld [vmem:[#allocation7 + $0x5c] sm:$0xf]
    %v404 = vld [vmem:[%s5] sm:$0x1]
    %v421 = vunpack.c.l.b16 %v388
    %v422 = vunpack.c.h.b16 %v388
    %v423 = vunpack.c.l.b16 %v389
    %v424 = vunpack.c.l.b16 %v390
    %v425 = vunpack.c.h.b16 %v390
    %v426 = vunpack.c.l.b16 %v391
    %v427 = vunpack.c.l.b16 %v392
    %v428 = vunpack.c.h.b16 %v392
    %v429 = vunpack.c.l.b16 %v393
    %v430 = vunpack.c.l.b16 %v394
    %v431 = vunpack.c.h.b16 %v394
    %v432 = vunpack.c.l.b16 %v395
    %v433 = vunpack.c.l.b16 %v396
    %v434 = vunpack.c.h.b16 %v396
    %v435 = vunpack.c.l.b16 %v397
    %v436 = vunpack.c.l.b16 %v398
    %v437 = vunpack.c.h.b16 %v398
    %v438 = vunpack.c.l.b16 %v399
    %v439 = vunpack.c.l.b16 %v400
    %v440 = vunpack.c.h.b16 %v400
    %v441 = vunpack.c.l.b16 %v401
    %v442 = vunpack.c.l.b16 %v402
    %v443 = vunpack.c.h.b16 %v402
    %v444 = vunpack.c.l.b16 %v403
    %v445 = vpack.c.b16 %v424, %v421
    %v446 = vpack.c.b16 %v425, %v422
    %v447 = vpack.c.b16 %v426, %v423
    %v448 = vpack.c.b16 %v430, %v427
    %v449 = vpack.c.b16 %v431, %v428
    %v450 = vpack.c.b16 %v432, %v429
    %v451 = vpack.c.b16 %v436, %v433
    %v452 = vpack.c.b16 %v437, %v434
    %v453 = vpack.c.b16 %v438, %v435
    %v454 = vpack.c.b16 %v442, %v439
    %v455 = vpack.c.b16 %v443, %v440
    %v456 = vpack.c.b16 %v444, %v441
    %vm469 = vcmask 523264
    %v471 = vsel %vm469, %v387, 0
    %473 = vmatprep.subr.bf16.mxu0 %v446
    %474 = vmatpush1.bf16.msra.mxu0 %v445
    %475 = vmatprep.subr.bf16.mxu0 %v449
    %476 = vmatpush1.bf16.msra.mxu0 %v448
    %477 = vmatprep.subr.bf16.mxu0 %v452
    %478 = vmatpush1.bf16.msra.mxu0 %v451
    %479 = vmatprep.subr.bf16.mxu0 %v455
    %480 = vmatpush1.bf16.msra.mxu0 %v454
    %481 = vmatprep.subr.bf16.mxu0 0
    %482 = vmatpush1.bf16.msra.mxu0 0
    %483 = vmatprep.subr.bf16.mxu0 0
    %484 = vmatpush1.bf16.msra.mxu0 0
    %485 = vmatprep.subr.bf16.mxu0 0
    %486 = vmatpush1.bf16.msra.mxu0 0
    %487 = vmatprep.subr.bf16.mxu0 0
    %488 = vmatpush1.bf16.msra.mxu0 0
    %489 = vmatprep.subr.bf16.mxu0 0
    %490 = vmatpush1.bf16.msra.mxu0 0
    %491 = vmatprep.subr.bf16.mxu0 0
    %492 = vmatpush1.bf16.msra.mxu0 0
    %493 = vmatprep.subr.bf16.mxu0 0
    %494 = vmatpush1.bf16.msra.mxu0 0
    %495 = vmatprep.subr.bf16.mxu0 0
    %496 = vmatpush1.bf16.msra.mxu0 0
    %497 = vmatprep.subr.bf16.mxu0 0
    %498 = vmatpush1.bf16.msra.mxu0 0
    %499 = vmatprep.subr.bf16.mxu0 0
    %500 = vmatpush1.bf16.msra.mxu0 0
    %501 = vmatprep.subr.bf16.mxu0 0
    %502 = vmatpush1.bf16.msra.mxu0 0
    %503 = vmatprep.subr.bf16.mxu0 0
    %504 = vmatpush1.bf16.msra.mxu0 0
    %505 = vmatprep.mubr.bf16.mxu0 0
    %506 = vmatmul.mubr.bf16.gmra.mrb[0].mxu0 %v471
    %v507 = vpop.f32.mrb[0].mxu0
    %v508 = vadd.f32 0.0, %v507
    %v509 = vpop.f32.mrb[0].mxu0
    %v510 = vadd.f32 0.0, %v509
    %v511 = vpop.f32.mrb[0].mxu0
    %v512 = vadd.f32 0.0, %v511
    %v513 = vpop.f32.mrb[0].mxu0
    %v514 = vadd.f32 0.0, %v513
    %515 = vdwg.mxu0
    %516 = vmatprep.subr.bf16.mxu0 0
    %517 = vmatpush1.bf16.msra.mxu0 %v447
    %518 = vmatprep.subr.bf16.mxu0 0
    %519 = vmatpush1.bf16.msra.mxu0 %v450
    %520 = vmatprep.subr.bf16.mxu0 0
    %521 = vmatpush1.bf16.msra.mxu0 %v453
    %522 = vmatprep.subr.bf16.mxu0 0
    %523 = vmatpush1.bf16.msra.mxu0 %v456
    %524 = vmatprep.subr.bf16.mxu0 0
    %525 = vmatpush1.bf16.msra.mxu0 0
    %526 = vmatprep.subr.bf16.mxu0 0
    %527 = vmatpush1.bf16.msra.mxu0 0
    %528 = vmatprep.subr.bf16.mxu0 0
    %529 = vmatpush1.bf16.msra.mxu0 0
    %530 = vmatprep.subr.bf16.mxu0 0
    %531 = vmatpush1.bf16.msra.mxu0 0
    %532 = vmatprep.subr.bf16.mxu0 0
    %533 = vmatpush1.bf16.msra.mxu0 0
    %534 = vmatprep.subr.bf16.mxu0 0
    %535 = vmatpush1.bf16.msra.mxu0 0
    %536 = vmatprep.subr.bf16.mxu0 0
    %537 = vmatpush1.bf16.msra.mxu0 0
    %538 = vmatprep.subr.bf16.mxu0 0
    %539 = vmatpush1.bf16.msra.mxu0 0
    %540 = vmatprep.subr.bf16.mxu0 0
    %541 = vmatpush1.bf16.msra.mxu0 0
    %542 = vmatprep.subr.bf16.mxu0 0
    %543 = vmatpush1.bf16.msra.mxu0 0
    %544 = vmatprep.subr.bf16.mxu0 0
    %545 = vmatpush1.bf16.msra.mxu0 0
    %546 = vmatprep.subr.bf16.mxu0 0
    %547 = vmatpush1.bf16.msra.mxu0 0
    %548 = vmatprep.mubr.bf16.mxu0 0
    %549 = vmatmul.mubr.bf16.gmra.mrb[0].mxu0 %v471
    %v550 = vpop.f32.mrb[0].mxu0
    %v551 = vadd.f32 0.0, %v550
    %v552 = vpop.f32.mrb[0].mxu0
    %v553 = vpop.f32.mrb[0].mxu0
    %v554 = vadd.f32 0.0, %v553
    %v555 = vpop.f32.mrb[0].mxu0
    %556 = vdwg.mxu0
    %v557 = vsel %vm243, %v551, -inf
    %558 = vmax.xlane.f32.xlu0 %v557
    %v559 = vpop.xlane.xlu0 %558
    %v560 = vsel %vm243, %v554, -inf
    %561 = vmax.xlane.f32.xlu0 %v560
    %v562 = vpop.xlane.xlu0 %561
    %v563 = vsub.f32 %v551, %v559
    %v564 = vsub.f32 %v554, %v562
    %v565 = vmul.f32 %v563, 1.442695
    %v566 = vpow.pop %v565
    %v567 = vmul.f32 %v564, 1.442695
    %v568 = vpow.pop %v567
    %v569 = vsel %vm243, %v566, 0.0
    %570 = vadd.xlane.f32.xlu0 %v569
    %v571 = vpop.xlane.xlu0 %570
    %v572 = vsel %vm243, %v568, 0.0
    %573 = vadd.xlane.f32.xlu0 %v572
    %v574 = vpop.xlane.xlu0 %573
    %v575 = vrcp.pop %v571
    %v576 = vrcp.pop %v574
    %v577 = vmul.f32 %v566, %v575
    %v578 = vmul.f32 %v568, %v576
    %580 = vset.pattern.permute.xlu0 0
    %581 = vperm.xlu0 %580, %v577
    %v582 = vpop.permute.xlu0 %581
    %585 = vset.pattern.permute.xlu0 0
    %586 = vperm.xlu0 %585, %v578
    %v587 = vpop.permute.xlu0 %586
    %v589 = vmul.f32 %v582, %v508
    %v590 = vmul.f32 %v587, %v512
    %591 = vset.pattern.permute.xlu0 1
    %592 = vperm.xlu0 %591, %v577
    %v593 = vpop.permute.xlu0 %592
    %595 = vset.pattern.permute.xlu0 1
    %596 = vperm.xlu0 %595, %v578
    %v597 = vpop.permute.xlu0 %596
    %v599 = vmul.f32 %v593, %v508
    %v600 = vmul.f32 %v597, %v512
    %603 = vrot.lane.b32.xlu0 %v599, 64
    %v604 = vpop.permute.xlu0 %603
    %605 = vrot.lane.b32.xlu0 %v600, 64
    %v606 = vpop.permute.xlu0 %605
    %v609 = vadd.f32 %v589, %v604
    %v610 = vadd.f32 %v590, %v606
    %611 = vset.pattern.permute.xlu0 2
    %612 = vperm.xlu0 %611, %v577
    %v613 = vpop.permute.xlu0 %612
    %615 = vset.pattern.permute.xlu0 2
    %616 = vperm.xlu0 %615, %v578
    %v617 = vpop.permute.xlu0 %616
    %v619 = vmul.f32 %v613, %v510
    %v620 = vmul.f32 %v617, %v514
    %v621 = vadd.f32 %v609, %v619
    %v622 = vadd.f32 %v610, %v620
    %623 = vset.pattern.permute.xlu0 3
    %624 = vperm.xlu0 %623, %v577
    %v625 = vpop.permute.xlu0 %624
    %627 = vset.pattern.permute.xlu0 3
    %628 = vperm.xlu0 %627, %v578
    %v629 = vpop.permute.xlu0 %628
    %v631 = vmul.f32 %v625, %v510
    %v632 = vmul.f32 %v629, %v514
    %635 = vrot.lane.b32.xlu0 %v631, 64
    %v636 = vpop.permute.xlu0 %635
    %637 = vrot.lane.b32.xlu0 %v632, 64
    %v638 = vpop.permute.xlu0 %637
    %v641 = vadd.f32 %v621, %v636
    %v642 = vadd.f32 %v622, %v638
    %v643 = vpack.c.bf16 %v642, %v641
    %v645 = vlaneseq
    %v646 = vshrl.u32 %v645, 7
    %v647 = vsub.s32 0, %v646
    %v648 = vrot.slane %v404, %v647
    %650 = vmatprep.subr.bf16.mxu0 0
    %651 = vmatpush1.bf16.msra.mxu0 %v643
    %652 = vmatprep.subr.bf16.mxu0 0
    %653 = vmatpush1.bf16.msra.mxu0 0
    %654 = vmatprep.subr.bf16.mxu0 0
    %655 = vmatpush1.bf16.msra.mxu0 0
    %656 = vmatprep.subr.bf16.mxu0 0
    %657 = vmatpush1.bf16.msra.mxu0 0
    %658 = vmatprep.subr.bf16.mxu0 0
    %659 = vmatpush1.bf16.msra.mxu0 0
    %660 = vmatprep.subr.bf16.mxu0 0
    %661 = vmatpush1.bf16.msra.mxu0 0
    %662 = vmatprep.subr.bf16.mxu0 0
    %663 = vmatpush1.bf16.msra.mxu0 0
    %664 = vmatprep.subr.bf16.mxu0 0
    %665 = vmatpush1.bf16.msra.mxu0 0
    %666 = vmatprep.subr.bf16.mxu0 0
    %667 = vmatpush1.bf16.msra.mxu0 0
    %668 = vmatprep.subr.bf16.mxu0 0
    %669 = vmatpush1.bf16.msra.mxu0 0
    %670 = vmatprep.subr.bf16.mxu0 0
    %671 = vmatpush1.bf16.msra.mxu0 0
    %672 = vmatprep.subr.bf16.mxu0 0
    %673 = vmatpush1.bf16.msra.mxu0 0
    %674 = vmatprep.subr.bf16.mxu0 0
    %675 = vmatpush1.bf16.msra.mxu0 0
    %676 = vmatprep.subr.bf16.mxu0 0
    %677 = vmatpush1.bf16.msra.mxu0 0
    %678 = vmatprep.subr.bf16.mxu0 0
    %679 = vmatpush1.bf16.msra.mxu0 0
    %680 = vmatprep.subr.bf16.mxu0 0
    %681 = vmatpush1.bf16.msra.mxu0 0
    %682 = vmatprep.mubr.bf16.mxu0 0
    %683 = vmatmul.mubr.bf16.gmra.mrb[0].mxu0 %v344
    %v684 = vpop.f32.mrb[0].mxu0
    %v685 = vadd.f32 %v648, %v684
    %v686 = vpop.f32.mrb[0].mxu0
    %v687 = vpop.f32.mrb[0].mxu0
    %v688 = vadd.f32 %v648, %v687
    %v689 = vpop.f32.mrb[0].mxu0
    %690 = vdwg.mxu0
    %v691 = vpack.c.bf16 %v688, %v685
    %v692 = vld [vmem:[#allocation8] sm:$0xff]
    %v693 = vld [vmem:[#allocation8 + $0x8] sm:$0xff]
    %v694 = vld [vmem:[#allocation8 + $0x10] sm:$0xff]
    %v695 = vld [vmem:[#allocation8 + $0x18] sm:$0xff]
    %v696 = vld [vmem:[#allocation8 + $0x20] sm:$0xff]
    %v697 = vld [vmem:[#allocation8 + $0x28] sm:$0xff]
    %v698 = vld [vmem:[#allocation8 + $0x30] sm:$0xff]
    %v699 = vld [vmem:[#allocation8 + $0x38] sm:$0xff]
    %v700 = vld [vmem:[%s7] sm:$0x1]
    %v709 = vunpack.c.l.b16 %v692
    %v710 = vunpack.c.h.b16 %v692
    %v711 = vunpack.c.l.b16 %v693
    %v712 = vunpack.c.h.b16 %v693
    %v713 = vunpack.c.l.b16 %v694
    %v714 = vunpack.c.h.b16 %v694
    %v715 = vunpack.c.l.b16 %v695
    %v716 = vunpack.c.h.b16 %v695
    %v717 = vunpack.c.l.b16 %v696
    %v718 = vunpack.c.h.b16 %v696
    %v719 = vunpack.c.l.b16 %v697
    %v720 = vunpack.c.h.b16 %v697
    %v721 = vunpack.c.l.b16 %v698
    %v722 = vunpack.c.h.b16 %v698
    %v723 = vunpack.c.l.b16 %v699
    %v724 = vunpack.c.h.b16 %v699
    %v725 = vpack.c.b16 %v711, %v709
    %v726 = vpack.c.b16 %v712, %v710
    %v727 = vpack.c.b16 %v715, %v713
    %v728 = vpack.c.b16 %v716, %v714
    %v729 = vpack.c.b16 %v719, %v717
    %v730 = vpack.c.b16 %v720, %v718
    %v731 = vpack.c.b16 %v723, %v721
    %v732 = vpack.c.b16 %v724, %v722
    %v742 = vsel %vm469, %v691, 0
    %744 = vmatprep.subr.bf16.mxu0 %v726
    %745 = vmatpush1.bf16.msra.mxu0 %v725
    %746 = vmatprep.subr.bf16.mxu0 %v728
    %747 = vmatpush1.bf16.msra.mxu0 %v727
    %748 = vmatprep.subr.bf16.mxu0 %v730
    %749 = vmatpush1.bf16.msra.mxu0 %v729
    %750 = vmatprep.subr.bf16.mxu0 %v732
    %751 = vmatpush1.bf16.msra.mxu0 %v731
    %752 = vmatprep.subr.bf16.mxu0 0
    %753 = vmatpush1.bf16.msra.mxu0 0
    %754 = vmatprep.subr.bf16.mxu0 0
    %755 = vmatpush1.bf16.msra.mxu0 0
    %756 = vmatprep.subr.bf16.mxu0 0
    %757 = vmatpush1.bf16.msra.mxu0 0
    %758 = vmatprep.subr.bf16.mxu0 0
    %759 = vmatpush1.bf16.msra.mxu0 0
    %760 = vmatprep.subr.bf16.mxu0 0
    %761 = vmatpush1.bf16.msra.mxu0 0
    %762 = vmatprep.subr.bf16.mxu0 0
    %763 = vmatpush1.bf16.msra.mxu0 0
    %764 = vmatprep.subr.bf16.mxu0 0
    %765 = vmatpush1.bf16.msra.mxu0 0
    %766 = vmatprep.subr.bf16.mxu0 0
    %767 = vmatpush1.bf16.msra.mxu0 0
    %768 = vmatprep.subr.bf16.mxu0 0
    %769 = vmatpush1.bf16.msra.mxu0 0
    %770 = vmatprep.subr.bf16.mxu0 0
    %771 = vmatpush1.bf16.msra.mxu0 0
    %772 = vmatprep.subr.bf16.mxu0 0
    %773 = vmatpush1.bf16.msra.mxu0 0
    %774 = vmatprep.subr.bf16.mxu0 0
    %775 = vmatpush1.bf16.msra.mxu0 0
    %776 = vmatprep.mubr.bf16.mxu0 0
    %777 = vmatmul.mubr.bf16.gmra.mrb[0].mxu0 %v742
    %v778 = vpop.f32.mrb[0].mxu0
    %v779 = vadd.f32 0.0, %v778
    %v780 = vpop.f32.mrb[0].mxu0
    %v781 = vadd.f32 0.0, %v780
    %v782 = vpop.f32.mrb[0].mxu0
    %v783 = vadd.f32 0.0, %v782
    %v784 = vpop.f32.mrb[0].mxu0
    %v785 = vadd.f32 0.0, %v784
    %786 = vdwg.mxu0
    %v787 = vsel %vm243, %v781, -inf
    %788 = vmax.xlane.f32.xlu0 %v787
    %v789 = vpop.xlane.xlu0 %788
    %v790 = vsel %vm243, %v785, -inf
    %791 = vmax.xlane.f32.xlu0 %v790
    %v792 = vpop.xlane.xlu0 %791
    %v793 = vsub.f32 %v781, %v789
    %v794 = vsub.f32 %v785, %v792
    %v795 = vmul.f32 %v793, 1.442695
    %v796 = vpow.pop %v795
    %v797 = vmul.f32 %v794, 1.442695
    %v798 = vpow.pop %v797
    %v799 = vsel %vm243, %v796, 0.0
    %800 = vadd.xlane.f32.xlu0 %v799
    %v801 = vpop.xlane.xlu0 %800
    %v802 = vsel %vm243, %v798, 0.0
    %803 = vadd.xlane.f32.xlu0 %v802
    %v804 = vpop.xlane.xlu0 %803
    %v805 = vrcp.pop %v801
    %v806 = vrcp.pop %v804
    %v807 = vmul.f32 %v796, %v805
    %v808 = vmul.f32 %v798, %v806
    %810 = vset.pattern.permute.xlu0 0
    %811 = vperm.xlu0 %810, %v807
    %v812 = vpop.permute.xlu0 %811
    %815 = vset.pattern.permute.xlu0 0
    %816 = vperm.xlu0 %815, %v808
    %v817 = vpop.permute.xlu0 %816
    %v819 = vmul.f32 %v812, %v779
    %v820 = vmul.f32 %v817, %v783
    %821 = vset.pattern.permute.xlu0 1
    %822 = vperm.xlu0 %821, %v807
    %v823 = vpop.permute.xlu0 %822
    %825 = vset.pattern.permute.xlu0 1
    %826 = vperm.xlu0 %825, %v808
    %v827 = vpop.permute.xlu0 %826
    %v829 = vmul.f32 %v823, %v779
    %v830 = vmul.f32 %v827, %v783
    %833 = vrot.lane.b32.xlu0 %v829, 96
    %v834 = vpop.permute.xlu0 %833
    %835 = vrot.lane.b32.xlu0 %v830, 96
    %v836 = vpop.permute.xlu0 %835
    %v839 = vadd.f32 %v819, %v834
    %v840 = vadd.f32 %v820, %v836
    %841 = vset.pattern.permute.xlu0 2
    %842 = vperm.xlu0 %841, %v807
    %v843 = vpop.permute.xlu0 %842
    %845 = vset.pattern.permute.xlu0 2
    %846 = vperm.xlu0 %845, %v808
    %v847 = vpop.permute.xlu0 %846
    %v849 = vmul.f32 %v843, %v779
    %v850 = vmul.f32 %v847, %v783
    %853 = vrot.lane.b32.xlu0 %v849, 64
    %v854 = vpop.permute.xlu0 %853
    %855 = vrot.lane.b32.xlu0 %v850, 64
    %v856 = vpop.permute.xlu0 %855
    %v859 = vadd.f32 %v839, %v854
    %v860 = vadd.f32 %v840, %v856
    %861 = vset.pattern.permute.xlu0 3
    %862 = vperm.xlu0 %861, %v807
    %v863 = vpop.permute.xlu0 %862
    %865 = vset.pattern.permute.xlu0 3
    %866 = vperm.xlu0 %865, %v808
    %v867 = vpop.permute.xlu0 %866
    %v869 = vmul.f32 %v863, %v779
    %v870 = vmul.f32 %v867, %v783
    %873 = vrot.lane.b32.xlu0 %v869, 32
    %v874 = vpop.permute.xlu0 %873
    %875 = vrot.lane.b32.xlu0 %v870, 32
    %v876 = vpop.permute.xlu0 %875
    %v879 = vadd.f32 %v859, %v874
    %v880 = vadd.f32 %v860, %v876
    %v881 = vpack.c.bf16 %v880, %v879
    %v883 = vlaneseq
    %v884 = vshrl.u32 %v883, 7
    %v885 = vsub.s32 0, %v884
    %v886 = vrot.slane %v700, %v885
    %888 = vmatprep.subr.bf16.mxu0 0
    %889 = vmatpush1.bf16.msra.mxu0 %v881
    %890 = vmatprep.subr.bf16.mxu0 0
    %891 = vmatpush1.bf16.msra.mxu0 0
    %892 = vmatprep.subr.bf16.mxu0 0
    %893 = vmatpush1.bf16.msra.mxu0 0
    %894 = vmatprep.subr.bf16.mxu0 0
    %895 = vmatpush1.bf16.msra.mxu0 0
    %896 = vmatprep.subr.bf16.mxu0 0
    %897 = vmatpush1.bf16.msra.mxu0 0
    %898 = vmatprep.subr.bf16.mxu0 0
    %899 = vmatpush1.bf16.msra.mxu0 0
    %900 = vmatprep.subr.bf16.mxu0 0
    %901 = vmatpush1.bf16.msra.mxu0 0
    %902 = vmatprep.subr.bf16.mxu0 0
    %903 = vmatpush1.bf16.msra.mxu0 0
    %904 = vmatprep.subr.bf16.mxu0 0
    %905 = vmatpush1.bf16.msra.mxu0 0
    %906 = vmatprep.subr.bf16.mxu0 0
    %907 = vmatpush1.bf16.msra.mxu0 0
    %908 = vmatprep.subr.bf16.mxu0 0
    %909 = vmatpush1.bf16.msra.mxu0 0
    %910 = vmatprep.subr.bf16.mxu0 0
    %911 = vmatpush1.bf16.msra.mxu0 0
    %912 = vmatprep.subr.bf16.mxu0 0
    %913 = vmatpush1.bf16.msra.mxu0 0
    %914 = vmatprep.subr.bf16.mxu0 0
    %915 = vmatpush1.bf16.msra.mxu0 0
    %916 = vmatprep.subr.bf16.mxu0 0
    %917 = vmatpush1.bf16.msra.mxu0 0
    %918 = vmatprep.subr.bf16.mxu0 0
    %919 = vmatpush1.bf16.msra.mxu0 0
    %920 = vmatprep.mubr.bf16.mxu0 0
    %921 = vmatmul.mubr.bf16.gmra.mrb[0].mxu0 %v344
    %v922 = vpop.f32.mrb[0].mxu0
    %v923 = vadd.f32 %v886, %v922
    %v924 = vpop.f32.mrb[0].mxu0
    %v925 = vpop.f32.mrb[0].mxu0
    %v926 = vadd.f32 %v886, %v925
    %v927 = vpop.f32.mrb[0].mxu0
    %928 = vdwg.mxu0
    %v929 = vpack.c.bf16 %v926, %v923
    %v930 = vld [vmem:[#allocation10] sm:$0xf]
    %v931 = vld [vmem:[#allocation10 + $0x4] sm:$0xf]
    %v934 = vunpack.c.l.b16 %v930
    %v935 = vunpack.c.l.b16 %v931
    %v936 = vpack.c.b16 %v935, %v934
    %v938 = vsel %vm342, %v936, 0
    %940 = vmatprep.subr.bf16.mxu0 0
    %941 = vmatpush1.bf16.msra.mxu0 %v929
    %942 = vmatprep.subr.bf16.mxu0 0
    %943 = vmatpush1.bf16.msra.mxu0 0
    %944 = vmatprep.subr.bf16.mxu0 0
    %945 = vmatpush1.bf16.msra.mxu0 0
    %946 = vmatprep.subr.bf16.mxu0 0
    %947 = vmatpush1.bf16.msra.mxu0 0
    %948 = vmatprep.subr.bf16.mxu0 0
    %949 = vmatpush1.bf16.msra.mxu0 0
    %950 = vmatprep.subr.bf16.mxu0 0
    %951 = vmatpush1.bf16.msra.mxu0 0
    %952 = vmatprep.subr.bf16.mxu0 0
    %953 = vmatpush1.bf16.msra.mxu0 0
    %954 = vmatprep.subr.bf16.mxu0 0
    %955 = vmatpush1.bf16.msra.mxu0 0
    %956 = vmatprep.subr.bf16.mxu0 0
    %957 = vmatpush1.bf16.msra.mxu0 0
    %958 = vmatprep.subr.bf16.mxu0 0
    %959 = vmatpush1.bf16.msra.mxu0 0
    %960 = vmatprep.subr.bf16.mxu0 0
    %961 = vmatpush1.bf16.msra.mxu0 0
    %962 = vmatprep.subr.bf16.mxu0 0
    %963 = vmatpush1.bf16.msra.mxu0 0
    %964 = vmatprep.subr.bf16.mxu0 0
    %965 = vmatpush1.bf16.msra.mxu0 0
    %966 = vmatprep.subr.bf16.mxu0 0
    %967 = vmatpush1.bf16.msra.mxu0 0
    %968 = vmatprep.subr.bf16.mxu0 0
    %969 = vmatpush1.bf16.msra.mxu0 0
    %970 = vmatprep.subr.bf16.mxu0 0
    %971 = vmatpush1.bf16.msra.mxu0 0
    %972 = vmatprep.mubr.bf16.mxu0 0
    %973 = vmatmul.mubr.bf16.gmra.mrb[0].mxu0 %v938
    %v974 = vpop.f32.mrb[0].mxu0
    %v975 = vadd.f32 0.0, %v974
    %v976 = vpop.f32.mrb[0].mxu0
    %v977 = vpop.f32.mrb[0].mxu0
    %v978 = vadd.f32 0.0, %v977
    %v979 = vpop.f32.mrb[0].mxu0
    %980 = vdwg.mxu0
    %v981 = vmul.f32 %v975, %v978
    %v982 = vld [vmem:[%s8] sm:$0x1]
    %v984 = vlaneseq
    %v985 = vshrl.u32 %v984, 7
    %v986 = vsub.s32 0, %v985
    %v987 = vrot.slane %v982, %v986
    %v989 = vmul.f32 %v981, %v987
    %v990 = vsel %vm155, %v989, 0.0
    %991 = vadd.xlane.f32.xlu0 %v990
    %v992 = vpop.xlane.xlu0 %991
    %v993 = vld [vmem:[#allocation2] sm:$0x1]
    %v995 = vlaneseq
    %v996 = vshrl.u32 %v995, 7
    %v997 = vsub.s32 0, %v996
    %v998 = vrot.slane %v993, %v997
    %v1000 = vadd.f32 %v992, %v998
    %1001 = vst [vmem:[%s11] sm:$0xff] 0.0
    %1002 = vst [vmem:[%s11 + $0x8] sm:$0xff] 0.0
    %1003 = vst.msk [vmem:[%s11] sm:$0xff] %vm155, %v923
    %1004 = vst.msk [vmem:[%s11 + $0x8] sm:$0xff] %vm155, %v926
    %1007 = vrot.lane.b32.xlu0 %v237, 32
    %v1008 = vpop.permute.xlu0 %1007
    %1009 = vrot.lane.b32.xlu0 %v240, 32
    %v1010 = vpop.permute.xlu0 %1009
    %vm1013 = vcmask 294144
    %1014 = vst.msk [vmem:[%s11] sm:$0xff] %vm1013, %v1008
    %1015 = vst.msk [vmem:[%s11 + $0x8] sm:$0xff] %vm1013, %v1010
    %1018 = vrot.lane.b32.xlu0 %v551, 36
    %v1019 = vpop.permute.xlu0 %1018
    %1020 = vrot.lane.b32.xlu0 %v554, 36
    %v1021 = vpop.permute.xlu0 %1020
    %vm1024 = vcmask 326944
    %1025 = vst.msk [vmem:[%s11] sm:$0xff] %vm1024, %v1019
    %1026 = vst.msk [vmem:[%s11 + $0x8] sm:$0xff] %vm1024, %v1021
    %1029 = vrot.lane.b32.xlu0 %v781, 40
    %v1030 = vpop.permute.xlu0 %1029
    %1031 = vrot.lane.b32.xlu0 %v785, 40
    %v1032 = vpop.permute.xlu0 %1031
    %vm1035 = vcmask 359744
    %1036 = vst.msk [vmem:[%s11] sm:$0xff] %vm1035, %v1030
    %1037 = vst.msk [vmem:[%s11 + $0x8] sm:$0xff] %vm1035, %v1032
    %1039 = vrot.lane.b32.xlu0 %v1000, 44
    %v1040 = vpop.permute.xlu0 %1039
    %vm1042 = vcmask 367968
    %1043 = vst.msk [vmem:[%s11] sm:$0xff] %vm1042, %v1040
    // Predicated region
    $region66: #{gcn_m_forward.1} parent=1 // pred_check
      _
    $region67: #{gcn_m_forward.1} parent=1 // pred_check_branch
      %1045 = sbr.rel (0) target = $region69
    $region68: #{gcn_m_forward.1} parent=1 // pred_region
      _
    $region69: #{gcn_m_forward.1} parent=1 // pred_fallthru
      _
    // Predicated region
    $region70: #{gcn_m_forward.1} parent=1 // pred_check
      _
    $region71: #{gcn_m_forward.1} parent=1 // pred_check_branch
      %1047 = sbr.rel (0) target = $region73
    $region72: #{gcn_m_forward.1} parent=1 // pred_region
      _
    $region73: #{gcn_m_forward.1} parent=1 // pred_fallthru
      _
    %1048 = vsyncpa [#allocation4], 1
    %1049 = vsyncpa [#allocation6], 1
    %1050 = vsyncpa [#allocation9], 1

</llo_original>
